<compile_context>
chip_gen: v6e
topology: v6e:2x2x1
jax: 0.10.0
libtpu: 0.0.40
codegen_flags: <defaults>
</compile_context>

<pallas_src>
import jax
import jax.numpy as jnp
from jax.experimental import pallas as pl
from jax.experimental.pallas import tpu as pltpu


_LANE = 128
_SUBLANE = 8


def _round_up(x, m):
    return ((x + m - 1) // m) * m


def _chip_config():
    """Generation-aware partition count, per-input tile budget and VMEM limit."""
    try:
        kind = jax.devices()[0].device_kind.lower()
    except Exception:  # pragma: no cover - defensive
        kind = ""
    if "v7" in kind:
        # 2 TensorCores, 64 MiB physical VMEM per core: real core split, modest tiles.
        return dict(num_parts=2, part_sem=pltpu.CORE_PARALLEL,
                    tile_bytes=4 << 20, vmem_limit=44 << 20)
    if "v6" in kind:
        # Single TC, 128 MiB VMEM: larger tiles amortize per-step overhead.
        return dict(num_parts=1, part_sem=pltpu.ARBITRARY,
                    tile_bytes=6 << 20, vmem_limit=64 << 20)
    # v5e / v5p / unknown: single partition, conservative budgets (v5e scoped
    # default is only 16 MiB, so the explicit vmem_limit override matters).
    return dict(num_parts=1, part_sem=pltpu.ARBITRARY,
                tile_bytes=4 << 20, vmem_limit=48 << 20)


def _make_kernel(tile_m, n, m_valid, tiles_per_part, needs_mask):
    folds = tile_m // _SUBLANE

    def _accum(out_ref, e2):
        # (tile_m, n) -> (folds, 8, n) -> (8, n): pure VPU adds, no cross-lane work.
        partial = jnp.sum(e2.reshape(folds, _SUBLANE, n), axis=0)
        out_ref[...] += partial[None]

    def kernel(fx_ref, g_ref, c_ref, out_ref):
        p = pl.program_id(0)
        i = pl.program_id(1)

        # Zero the resident partial-sum block at the start of each partition.
        @pl.when(i == 0)
        def _init():
            out_ref[...] = jnp.zeros_like(out_ref)

        # Cast AFTER the load so HBM traffic stays in the caller's dtype.
        fx = fx_ref[...].astype(jnp.float32)
        g = g_ref[...].astype(jnp.float32)
        c = c_ref[...].astype(jnp.float32)            # (1, n), broadcast over rows

        d = fx - g
        e = d * d - c                                  # |fx - g|^2 - c
        e2 = e * e

        if not needs_mask:
            # Grid exactly covers M: no masking anywhere (static fast path).
            _accum(out_ref, e2)
        else:
            row_start = (p * tiles_per_part + i) * tile_m
            is_boundary = row_start + tile_m > m_valid

            @pl.when(jnp.logical_not(is_boundary))
            def _interior():
                _accum(out_ref, e2)

            @pl.when(is_boundary)
            def _boundary():
                rows = row_start + jax.lax.broadcasted_iota(
                    jnp.int32, (tile_m, 1), 0)
                # where(), not multiply: over-read garbage may be NaN/Inf.
                _accum(out_ref, jnp.where(rows < m_valid, e2, 0.0))

    return kernel


def mse_loss_uncertainty(fx, g_noisy, c):
    """fx, g_noisy: (B, C, N); c: (N,). Returns the scalar PyTorch loss (f32)."""
    B, C, N = fx.shape
    M = B * C
    cfg = _chip_config()
    num_parts = cfg["num_parts"]

    itemsize = jnp.dtype(fx.dtype).itemsize
    n_lanes = _round_up(N, _LANE)  # physical lane footprint, for VMEM budgeting only

    # Largest row tile (multiple of 8) that keeps 2 inputs x 2 double-buffers plus
    # the f32 elementwise temp inside this generation's VMEM budget.
    tile_cap = max(_SUBLANE,
                   (cfg["tile_bytes"] // (n_lanes * itemsize)) // _SUBLANE * _SUBLANE)
    rows_per_part = pl.cdiv(M, num_parts)
    tile_m = int(min(tile_cap, _round_up(rows_per_part, _SUBLANE)))

    tiles_total = pl.cdiv(M, tile_m)
    tiles_per_part = pl.cdiv(tiles_total, num_parts)
    needs_mask = num_parts * tiles_per_part * tile_m > M   # static

    # Free reshapes only -- no padding, no extra HBM traffic.
    fx2 = fx.reshape(M, N)
    g2 = g_noisy.reshape(M, N)
    c2 = c.reshape(1, N)

    kernel = _make_kernel(tile_m, N, M, tiles_per_part, needs_mask)

    row_block = lambda p, i: (p * tiles_per_part + i, 0)
    grid_spec = pltpu.PrefetchScalarGridSpec(
        num_scalar_prefetch=0,
        grid=(num_parts, tiles_per_part),
        in_specs=[
            pl.BlockSpec((tile_m, N), row_block),        # fx tile (full-width rows)
            pl.BlockSpec((tile_m, N), row_block),        # g tile
            pl.BlockSpec((1, N), lambda p, i: (0, 0)),   # c: fetched once, resident
        ],
        out_specs=pl.BlockSpec((1, _SUBLANE, N), lambda p, i: (p, 0, 0)),
    )

    cost = pl.CostEstimate(
        flops=5 * M * N,
        transcendentals=0,
        bytes_accessed=(2 * M * N * itemsize
                        + N * jnp.dtype(c.dtype).itemsize
                        + num_parts * _SUBLANE * N * 4),
    )

    partials = pl.pallas_call(
        kernel,
        out_shape=jax.ShapeDtypeStruct((num_parts, _SUBLANE, N), jnp.float32),
        grid_spec=grid_spec,
        compiler_params=pltpu.CompilerParams(
            dimension_semantics=(cfg["part_sem"], pltpu.ARBITRARY),
            vmem_limit_bytes=cfg["vmem_limit"],
        ),
        cost_estimate=cost,
    )(fx2, g2, c2)

    # Mean over the broadcast shape (B, C, N), matching nn.MSELoss(reduction='mean').
    inv_count = 1.0 / float(M * N)   # exact reciprocal computed in double precision
    return jnp.sum(partials) * jnp.float32(inv_count)


if __name__ == "__main__":
    key = jax.random.PRNGKey(0)
    k_fx, k_g, k_c = jax.random.split(key, 3)

    # Small shapes consistent with the module's (.., .., n) layout.
    B, C, N = 2, 4, 128
    fx = jax.random.normal(k_fx, (B, C, N), dtype=jnp.float32)
    g_noisy = jax.random.normal(k_g, (B, C, N), dtype=jnp.float32)
    c = jax.random.uniform(k_c, (N,), dtype=jnp.float32, minval=0.1, maxval=1.0)

    loss = jax.block_until_ready(mse_loss_uncertainty(fx, g_noisy, c))

    # Pure-JAX reference of the exact PyTorch semantics.
    z1 = jnp.abs(fx - g_noisy) ** 2
    ref = jnp.mean((z1 - c.reshape(1, 1, N)) ** 2)
    assert jnp.allclose(loss, ref, rtol=1e-5, atol=1e-6), (loss, ref)

    # Ragged-row case (M not a multiple of the tile): exercises the masked
    # boundary-tile path with no wrapper-side padding.
    B2, C2, N2 = 3, 1, 128
    fx_r = jax.random.normal(k_fx, (B2, C2, N2), dtype=jnp.float32)
    g_r = jax.random.normal(k_g, (B2, C2, N2), dtype=jnp.float32)
    c_r = jax.random.uniform(k_c, (N2,), dtype=jnp.float32, minval=0.1, maxval=1.0)
    loss_r = jax.block_until_ready(mse_loss_uncertainty(fx_r, g_r, c_r))
    ref_r = jnp.mean((jnp.abs(fx_r - g_r) ** 2 - c_r.reshape(1, 1, N2)) ** 2)
    assert jnp.allclose(loss_r, ref_r, rtol=1e-5, atol=1e-6), (loss_r, ref_r)

    print("KERNEL_OK")
</pallas_src>

<mosaic_0001>
module attributes {stable_mosaic.version = 11 : i64} {
  func.func @kernel(%arg0: i32, %arg1: i32, %arg2: memref<8x128xf32, #tpu.memory_space<vmem>>, %arg3: memref<8x128xf32, #tpu.memory_space<vmem>>, %arg4: memref<1x128xf32, #tpu.memory_space<vmem>>, %arg5: memref<1x8x128xf32, #tpu.memory_space<vmem>>) attributes {dimension_semantics = [#tpu.dimension_semantics<arbitrary>, #tpu.dimension_semantics<arbitrary>], iteration_bounds = array<i64: 1, 1>, scalar_prefetch = 0 : i64, scratch_operands = 0 : i64, tpu.core_type = #tpu.core_type<tc>, window_params = [{transform_indices = @transform_0, window_bounds = array<i64: 8, 128>}, {transform_indices = @transform_1, window_bounds = array<i64: 8, 128>}, {pipeline_mode = #tpu.pipeline_mode<synchronous>, transform_indices = @transform_2, window_bounds = array<i64: 1, 128>}, {transform_indices = @transform_3, window_bounds = array<i64: 1, 8, 128>}]} {
    %c0_i32 = arith.constant 0 : i32
    %0 = arith.cmpi eq, %arg1, %c0_i32 : i32
    %1 = arith.extui %0 : i1 to i32
    %c0_i32_0 = arith.constant 0 : i32
    %2 = arith.cmpi ne, %1, %c0_i32_0 : i32
    scf.if %2 {
      %cst_12 = arith.constant 0.000000e+00 : f32
      %17 = vector.broadcast %cst_12 : f32 to vector<1x8x128xf32>
      %c0_13 = arith.constant 0 : index
      %c0_14 = arith.constant 0 : index
      %c0_15 = arith.constant 0 : index
      %18 = vector.load %arg5[%c0_13, %c0_14, %c0_15] : memref<1x8x128xf32, #tpu.memory_space<vmem>>, vector<1x8x128xf32>
      tpu.vector_store %arg5[%c0_13, %c0_14, %c0_15], %17 {strides = array<i32>} : memref<1x8x128xf32, #tpu.memory_space<vmem>>, vector<1x8x128xf32>,
    } else {
    }
    %c0 = arith.constant 0 : index
    %c0_1 = arith.constant 0 : index
    %3 = vector.load %arg2[%c0, %c0_1] : memref<8x128xf32, #tpu.memory_space<vmem>>, vector<8x128xf32>
    %c0_2 = arith.constant 0 : index
    %c0_3 = arith.constant 0 : index
    %4 = vector.load %arg3[%c0_2, %c0_3] : memref<8x128xf32, #tpu.memory_space<vmem>>, vector<8x128xf32>
    %c0_4 = arith.constant 0 : index
    %c0_5 = arith.constant 0 : index
    %5 = vector.load %arg4[%c0_4, %c0_5] : memref<1x128xf32, #tpu.memory_space<vmem>>, vector<1x128xf32>
    %6 = arith.subf %3, %4 : vector<8x128xf32>
    %7 = arith.mulf %6, %6 : vector<8x128xf32>
    %8 = vector.broadcast %5 : vector<1x128xf32> to vector<8x128xf32>
    %9 = arith.subf %7, %8 : vector<8x128xf32>
    %10 = arith.mulf %9, %9 : vector<8x128xf32>
    %11 = vector.shape_cast %10 : vector<8x128xf32> to vector<1x8x128xf32>
    %cst = arith.constant dense<0.000000e+00> : vector<8x128xf32>
    %12 = vector.multi_reduction <add>, %11, %cst [0] : vector<1x8x128xf32> to vector<8x128xf32>
    %c0_6 = arith.constant 0 : index
    %c0_7 = arith.constant 0 : index
    %c0_8 = arith.constant 0 : index
    %13 = vector.load %arg5[%c0_6, %c0_7, %c0_8] : memref<1x8x128xf32, #tpu.memory_space<vmem>>, vector<1x8x128xf32>
    %14 = vector.shape_cast %12 : vector<8x128xf32> to vector<1x8x128xf32>
    %15 = arith.addf %13, %14 : vector<1x8x128xf32>
    %c0_9 = arith.constant 0 : index
    %c0_10 = arith.constant 0 : index
    %c0_11 = arith.constant 0 : index
    %16 = vector.load %arg5[%c0_9, %c0_10, %c0_11] : memref<1x8x128xf32, #tpu.memory_space<vmem>>, vector<1x8x128xf32>
    tpu.vector_store %arg5[%c0_9, %c0_10, %c0_11], %15 {strides = array<i32>} : memref<1x8x128xf32, #tpu.memory_space<vmem>>, vector<1x8x128xf32>,
    return
  }
  func.func @transform_0(%arg0: i32, %arg1: i32) -> (i32, i32) {
    %c1_i32 = arith.constant 1 : i32
    %0 = arith.muli %arg0, %c1_i32 : i32
    %1 = arith.addi %0, %arg1 : i32
    %c0_i32 = arith.constant 0 : i32
    %c0_i32_0 = arith.constant 0 : i32
    return %1, %c0_i32 : i32, i32
  }
  func.func @transform_1(%arg0: i32, %arg1: i32) -> (i32, i32) {
    %c1_i32 = arith.constant 1 : i32
    %0 = arith.muli %arg0, %c1_i32 : i32
    %1 = arith.addi %0, %arg1 : i32
    %c0_i32 = arith.constant 0 : i32
    %c0_i32_0 = arith.constant 0 : i32
    return %1, %c0_i32 : i32, i32
  }
  func.func @transform_2(%arg0: i32, %arg1: i32) -> (i32, i32) {
    %c0_i32 = arith.constant 0 : i32
    %c0_i32_0 = arith.constant 0 : i32
    %c0_i32_1 = arith.constant 0 : i32
    return %c0_i32, %c0_i32_0 : i32, i32
  }
  func.func @transform_3(%arg0: i32, %arg1: i32) -> (i32, i32, i32) {
    %c0_i32 = arith.constant 0 : i32
    %c0_i32_0 = arith.constant 0 : i32
    %c0_i32_1 = arith.constant 0 : i32
    return %arg0, %c0_i32, %c0_i32_0 : i32, i32, i32
  }
}

</mosaic_0001>

<llo_original>
// kernel: tpu_custom_call.1
$region0: #{tpu_custom_call.1}
  #allocation0 [shape = 'u32[]', space=smem, size = 0x4, offset = 0x4, fixed_abs, tag = 'smem constant byte address 0x4 - core index']
  #allocation1 [shape = 'u32[144,128]{1,0:T(1,128)}', space=vmem, size = 0x12000, scoped, tag = 'internal scratch']
  %s0 = inlined_call_operand.hbm [shape: f32[8,128], index: 0, kind: input, shape index: {}]
  %s1 = inlined_call_operand.hbm [shape: f32[8,128], index: 1, kind: input, shape index: {}]
  %s2 = inlined_call_operand.vmem [shape: f32[1,128], index: 2, kind: input, shape index: {}]
  %s3 = inlined_call_operand.hbm [shape: f32[1,8,128], index: 3, kind: output, shape index: {}]
  %s4 = sld [smem:[#allocation0]]
  $region34: #{tpu_custom_call.1} parent=0
    _
  %s6 = ssub.s32 1, %s4
  %s7 = scalar_select 0, %s6, %s4
  $region1: #{tpu_custom_call.1} parent=0
    #allocation2 [shape = 'u8[4096]{0}', space=vmem, size = 0x1000, scoped, tag = 'input window, operand 0, single buffered']
    #allocation3 [shape = 's32[1]{0}', space=sflag, size = 0x4, scoped, tag = 'scoped memory for tpu_custom_call.1']
    #allocation4 [shape = 's32[1]{0}', space=sflag, size = 0x4, scoped, tag = 'scoped memory for tpu_custom_call.1']
    #allocation5 [shape = 'u8[4096]{0}', space=vmem, size = 0x1000, scoped, tag = 'input window, operand 1, single buffered']
    #allocation6 [shape = 's32[1]{0}', space=sflag, size = 0x4, scoped, tag = 'scoped memory for tpu_custom_call.1']
    #allocation7 [shape = 'u8[4096]{0}', space=vmem, size = 0x1000, scoped, tag = 'output window, operand 0, single buffered']
    %8 = vsyncpa [#allocation3], 0
    %9 = vsyncpa [#allocation6], 0
    %10 = vsyncpa [#allocation4], 0
    // Predicated region
    $region2: #{tpu_custom_call.1} parent=1 // pred_check
      _
    $region3: #{tpu_custom_call.1} parent=1 // pred_check_branch
      %12 = sbr.rel (0) target = $region5
    $region4: #{tpu_custom_call.1} parent=1 // pred_region
      %s13 = sadd.s32 0, 0
      %s15 = ssub.s32 128, 128
      %16 = vsyncadd [#allocation3], %s15
      %s17 = smul.addr %s13, 128
      %s18 = scalar_lea.hbm %s0, %s17
      %s20 = sshll.u32 [#allocation2], 4
      %s21 = int_to_ptr.vmem [resolvable:$true] %s20
      %23 = dma.hbm_to_vmem [thread:$0]  %s18, 128, %s21, [#allocation3]
    $region5: #{tpu_custom_call.1} parent=1 // pred_fallthru
      _
    // Predicated region
    $region6: #{tpu_custom_call.1} parent=1 // pred_check
      _
    $region7: #{tpu_custom_call.1} parent=1 // pred_check_branch
      %25 = sbr.rel (0) target = $region9
    $region8: #{tpu_custom_call.1} parent=1 // pred_region
      %s26 = sadd.s32 0, 0
      %s28 = ssub.s32 128, 128
      %29 = vsyncadd [#allocation6], %s28
      %s30 = smul.addr %s26, 128
      %s31 = scalar_lea.hbm %s1, %s30
      %s33 = sshll.u32 [#allocation5], 4
      %s34 = int_to_ptr.vmem [resolvable:$true] %s33
      %36 = dma.hbm_to_vmem [thread:$0]  %s31, 128, %s34, [#allocation6]
    $region9: #{tpu_custom_call.1} parent=1 // pred_fallthru
      _
    // Predicated region
    $region10: #{tpu_custom_call.1} parent=1 // pred_check
      _
    $region11: #{tpu_custom_call.1} parent=1 // pred_check_branch
      %38 = sbr.rel (0) target = $region13
    $region12: #{tpu_custom_call.1} parent=1 // pred_region
      _
    $region13: #{tpu_custom_call.1} parent=1 // pred_fallthru
      _
    // Predicated region
    $region14: #{tpu_custom_call.1} parent=1 // pred_check
      _
    $region15: #{tpu_custom_call.1} parent=1 // pred_check_branch
      %40 = sbr.rel (0) target = $region17
    $region16: #{tpu_custom_call.1} parent=1 // pred_region
      %41 = dma.done [#allocation3], 128
    $region17: #{tpu_custom_call.1} parent=1 // pred_fallthru
      _
    // Predicated region
    $region18: #{tpu_custom_call.1} parent=1 // pred_check
      _
    $region19: #{tpu_custom_call.1} parent=1 // pred_check_branch
      %43 = sbr.rel (0) target = $region21
    $region20: #{tpu_custom_call.1} parent=1 // pred_region
      %44 = dma.done [#allocation6], 128
    $region21: #{tpu_custom_call.1} parent=1 // pred_fallthru
      _
    %s45 = sadd.s32 0, 0
    %s46 = sadd.s32 0, 0
    %p47 = scmp.eq.s32.totalorder 0, 0
    // Predicated region
    $region22: #{tpu_custom_call.1} parent=1 // pred_check
      %p48 = pneg %p47
    $region23: #{tpu_custom_call.1} parent=1 // pred_check_branch
      %50 = sbr.rel (%p48) target = $region25
    $region24: #{tpu_custom_call.1} parent=1 // pred_region
      %51 = vst [vmem:[#allocation7] sm:$0xff] 0.0
    $region25: #{tpu_custom_call.1} parent=1 // pred_fallthru
      _
    %v52 = vld [vmem:[#allocation2] sm:$0xff]
    %v53 = vld [vmem:[#allocation5] sm:$0xff]
    %v54 = vld [vmem:[%s2] sm:$0x1]
    %v55 = vsub.f32 %v52, %v53
    %v56 = vmul.f32 %v55, %v55
    %v58 = vlaneseq
    %v59 = vshrl.u32 %v58, 7
    %v60 = vsub.s32 0, %v59
    %v61 = vrot.slane %v54, %v60
    %v63 = vsub.f32 %v56, %v61
    %v64 = vmul.f32 %v63, %v63
    %v65 = vadd.f32 %v64, 0.0
    %v66 = vld [vmem:[#allocation7] sm:$0xff]
    %v67 = vadd.f32 %v66, %v65
    %68 = vst [vmem:[#allocation7] sm:$0xff] %v67
    // Predicated region
    $region26: #{tpu_custom_call.1} parent=1 // pred_check
      _
    $region27: #{tpu_custom_call.1} parent=1 // pred_check_branch
      %70 = sbr.rel (0) target = $region29
    $region28: #{tpu_custom_call.1} parent=1 // pred_region
      %s72 = ssub.s32 128, 128
      %73 = vsyncadd [#allocation4], %s72
      %s75 = sshll.u32 [#allocation7], 4
      %s76 = int_to_ptr.vmem [resolvable:$true] %s75
      %78 = dma.vmem_to_hbm [thread:$0]  %s76, 128, %s3, [#allocation4]
    $region29: #{tpu_custom_call.1} parent=1 // pred_fallthru
      _
    // Predicated region
    $region30: #{tpu_custom_call.1} parent=1 // pred_check
      _
    $region31: #{tpu_custom_call.1} parent=1 // pred_check_branch
      %80 = sbr.rel (0) target = $region33
    $region32: #{tpu_custom_call.1} parent=1 // pred_region
      %81 = dma.done [#allocation4], 128
    $region33: #{tpu_custom_call.1} parent=1 // pred_fallthru
      _
    %82 = vsyncpa [#allocation3], 1
    %83 = vsyncpa [#allocation6], 1
    %84 = vsyncpa [#allocation4], 1

</llo_original>
